<compile_context>
chip_gen: v5e
topology: v5e:2x2
jax: 0.10.0
libtpu: 0.0.40
codegen_flags: <defaults>
</compile_context>

<pallas_src>
import jax
import jax.numpy as jnp
from jax.experimental import pallas as pl
from jax.experimental.pallas import tpu as pltpu

LANE = 128


def _round_up(x, m):
    return (x + m - 1) // m * m


# -----------------------------------------------------------------------------
# Kernel: one grid step = TB sentences.
#   x_ref  : (TB, S, D)        concatenated embeddings
#   m_ref  : (TB, S, 4)        [words_mask, piece1, piece2, piece3]
#   cw_ref : (K_pad, F_pad)    im2col conv weight (rows k*D+d, zero padded)
#   cb_ref : (1, F_pad)        conv bias (zero padded)
#   dw_ref : (3*F_pad, C_pad)  dense weight, piece-strided rows, zero padded
#   db_ref : (1, C_pad)        dense bias (zero padded)
#   o_ref  : (TB, C_pad)       logits (lane-dense, sliced to C outside)
# -----------------------------------------------------------------------------
def pcnn_kernel(x_ref, m_ref, cw_ref, cb_ref, dw_ref, db_ref, o_ref):
    TB, S, D = x_ref.shape
    K_pad, F_pad = cw_ref.shape

    m = m_ref[...]                                   # (TB, S, 4)
    xm = x_ref[...] * m[:, :, 0:1]                   # words-masked input

    # k=3, pad=1 conv -> im2col along lanes: [x(t-1) | x(t) | x(t+1) | 0-pad]
    zrow = jnp.zeros((TB, 1, D), dtype=xm.dtype)
    x_prev = jnp.concatenate([zrow, xm[:, :-1, :]], axis=1)
    x_next = jnp.concatenate([xm[:, 1:, :], zrow], axis=1)
    parts = [x_prev, xm, x_next]
    kpad = K_pad - 3 * D
    if kpad > 0:
        parts.append(jnp.zeros((TB, S, kpad), dtype=xm.dtype))
    xcat = jnp.concatenate(parts, axis=-1)           # (TB, S, K_pad)

    # Single fused conv matmul on the MXU: (TB*S, K_pad) @ (K_pad, F_pad)
    xflat = xcat.reshape(TB * S, K_pad)
    conv = (jnp.dot(xflat, cw_ref[...], preferred_element_type=jnp.float32)
            + cb_ref[...])                           # (TB*S, F_pad)
    conv = conv.reshape(TB, S, F_pad)

    neg_inf = jnp.float32(-jnp.inf)

    def piece_pool(j):
        pm = m[:, :, j:j + 1]                        # (TB, S, 1)
        masked = jnp.where(pm > 0, conv, neg_inf)    # masked_fill(-inf)
        return jnp.tanh(jnp.max(masked, axis=1))     # (TB, F_pad)

    feat = jnp.concatenate(
        [piece_pool(1), piece_pool(2), piece_pool(3)], axis=-1)  # (TB, 3*F_pad)

    # Batched dense layer, one matmul per block, lane-dense output write.
    o_ref[...] = (jnp.dot(feat, dw_ref[...], preferred_element_type=jnp.float32)
                  + db_ref[...])


def pcnn_forward(pcnn_input, words_mask, p1_mask, p2_mask, p3_mask,
                 conv_w, conv_b, dense_w, dense_b, *, tb=None):
    """pcnn_input: (B, S, D) f32; masks: (B, S) 0/1; conv_w: (3, D, F);
    dense_w: (3F, C). Returns (B, C) logits."""
    B, S, D = pcnn_input.shape
    F = conv_w.shape[-1]
    C = dense_w.shape[-1]

    K_pad = _round_up(3 * D, LANE)
    F_pad = _round_up(F, LANE)
    C_pad = _round_up(C, LANE)

    # Batch block: grab whole (small) batch in one step; for big batches use
    # multiples of 8 so the output block stays sublane-aligned and the grid
    # gets multiple "parallel" steps (v7x megacore).
    if tb is None:
        tb = B if B <= 8 else 8
    B_pad = _round_up(B, tb)

    x = pcnn_input.astype(jnp.float32)
    masks = jnp.stack([words_mask, p1_mask, p2_mask, p3_mask],
                      axis=-1).astype(jnp.float32)              # (B, S, 4)
    if B_pad > B:
        x = jnp.pad(x, ((0, B_pad - B), (0, 0), (0, 0)))
        masks = jnp.pad(masks, ((0, B_pad - B), (0, 0), (0, 0)))

    # Conv weight (3, D, F) -> im2col (3D, F), zero-padded to (K_pad, F_pad).
    cw = conv_w.astype(jnp.float32).reshape(3 * D, F)
    cw = jnp.pad(cw, ((0, K_pad - 3 * D), (0, F_pad - F)))
    cb = jnp.pad(conv_b.astype(jnp.float32).reshape(1, F),
                 ((0, 0), (0, F_pad - F)))

    # Dense weight (3F, C): place each piece's F rows at stride F_pad.
    dwe = dense_w.astype(jnp.float32)
    dw = jnp.zeros((3 * F_pad, C_pad), jnp.float32)
    for j in range(3):
        dw = dw.at[j * F_pad:j * F_pad + F, :C].set(dwe[j * F:(j + 1) * F, :])
    db = jnp.pad(dense_b.astype(jnp.float32).reshape(1, C),
                 ((0, 0), (0, C_pad - C)))

    grid = (B_pad // tb,)

    out = pl.pallas_call(
        pcnn_kernel,
        out_shape=jax.ShapeDtypeStruct((B_pad, C_pad), jnp.float32),
        grid_spec=pltpu.PrefetchScalarGridSpec(
            num_scalar_prefetch=0,
            grid=grid,
            in_specs=[
                pl.BlockSpec((tb, S, D), lambda b: (b, 0, 0)),       # x
                pl.BlockSpec((tb, S, 4), lambda b: (b, 0, 0)),       # merged masks
                pl.BlockSpec((K_pad, F_pad), lambda b: (0, 0)),      # conv W
                pl.BlockSpec((1, F_pad), lambda b: (0, 0)),          # conv b
                pl.BlockSpec((3 * F_pad, C_pad), lambda b: (0, 0)),  # dense W
                pl.BlockSpec((1, C_pad), lambda b: (0, 0)),          # dense b
            ],
            out_specs=pl.BlockSpec((tb, C_pad), lambda b: (b, 0)),
        ),
        compiler_params=pltpu.CompilerParams(
            dimension_semantics=("parallel",)),
    )(x, masks, cw, cb, dw, db)

    return out[:B, :C]


def reference_forward(pcnn_input, words_mask, p1, p2, p3,
                      conv_w, conv_b, dense_w, dense_b):
    xm = pcnn_input * words_mask[:, :, None]
    zero = jnp.zeros_like(xm[:, :1, :])
    x_prev = jnp.concatenate([zero, xm[:, :-1, :]], axis=1)
    x_next = jnp.concatenate([xm[:, 1:, :], zero], axis=1)
    out = (jnp.einsum('bsd,df->bsf', x_prev, conv_w[0])
           + jnp.einsum('bsd,df->bsf', xm, conv_w[1])
           + jnp.einsum('bsd,df->bsf', x_next, conv_w[2])
           + conv_b[None, None, :])

    def piece(pm):
        m = jnp.where(pm[:, :, None] > 0, out, -jnp.inf)
        return jnp.tanh(jnp.max(m, axis=1))

    feat = jnp.concatenate([piece(p1), piece(p2), piece(p3)], axis=1)
    return feat @ dense_w + dense_b[None, :]


if __name__ == "__main__":
    # ----- hyper-parameters implied by the module (small synthetic sizes) -----
    B, S = 2, 16
    word_vocab_size = 50
    dist_vocab_size = 20
    word_embed_dim = 24
    distance_embed_dim = 4
    input_dim = word_embed_dim + 2 * distance_embed_dim   # 32
    num_filter = 32
    class_count = 8

    key = jax.random.PRNGKey(0)
    keys = jax.random.split(key, 12)

    # Deterministic parameter init (padding_idx=0 rows zeroed).
    word_emb = jax.random.normal(keys[0], (word_vocab_size, word_embed_dim),
                                 jnp.float32) * 0.1
    word_emb = word_emb.at[0].set(0.0)
    dist1_emb = jax.random.normal(keys[1], (dist_vocab_size, distance_embed_dim),
                                  jnp.float32) * 0.1
    dist1_emb = dist1_emb.at[0].set(0.0)
    dist2_emb = jax.random.normal(keys[2], (dist_vocab_size, distance_embed_dim),
                                  jnp.float32) * 0.1
    dist2_emb = dist2_emb.at[0].set(0.0)

    # Conv1d weight in torch is (F, D, 3); stored here as (3, D, F).
    conv_w = jax.random.normal(keys[3], (3, input_dim, num_filter),
                               jnp.float32) * 0.1
    conv_b = jax.random.normal(keys[4], (num_filter,), jnp.float32) * 0.1
    dense_w = jax.random.normal(keys[5], (3 * num_filter, class_count),
                                jnp.float32) * 0.1
    dense_b = jax.random.normal(keys[6], (class_count,), jnp.float32) * 0.1

    # ----- inputs -----
    words_seq = jax.random.randint(keys[7], (B, S), 1, word_vocab_size)
    words_arg1_dist_seq = jax.random.randint(keys[8], (B, S), 1, dist_vocab_size)
    words_arg2_dist_seq = jax.random.randint(keys[9], (B, S), 1, dist_vocab_size)

    pos = jnp.arange(S)[None, :]
    valid_len = jnp.array([S, S - 4])[:, None]
    words_mask = (pos < valid_len).astype(jnp.float32)          # (B, S)
    piece1_mask = ((pos < 5) & (pos < valid_len)).astype(jnp.float32)
    piece2_mask = ((pos >= 5) & (pos < 10) & (pos < valid_len)).astype(jnp.float32)
    piece3_mask = ((pos >= 10) & (pos < valid_len)).astype(jnp.float32)

    # ----- embedding lookups + concat (glue, plain JAX) -----
    we = jnp.take(word_emb, words_seq, axis=0)                  # (B, S, We)
    d1 = jnp.take(dist1_emb, words_arg1_dist_seq, axis=0)       # (B, S, De)
    d2 = jnp.take(dist2_emb, words_arg2_dist_seq, axis=0)       # (B, S, De)
    pcnn_input = jnp.concatenate([we, d1, d2], axis=2)          # (B, S, D)
    # NOTE: dropout layers are identity at inference (is_training=False).

    # ----- Pallas kernel -----
    logits = pcnn_forward(pcnn_input, words_mask,
                          piece1_mask, piece2_mask, piece3_mask,
                          conv_w, conv_b, dense_w, dense_b)
    logits = jax.block_until_ready(logits)

    # ----- correctness check vs. pure-JAX reference -----
    ref = reference_forward(pcnn_input, words_mask,
                            piece1_mask, piece2_mask, piece3_mask,
                            conv_w, conv_b, dense_w, dense_b)
    ref = jax.block_until_ready(ref)
    assert logits.shape == (B, class_count)
    assert jnp.allclose(logits, ref, atol=1e-4, rtol=1e-4), "mismatch vs reference"

    print("KERNEL_OK")
</pallas_src>

<mosaic_0001>
module attributes {stable_mosaic.version = 11 : i64} {
  func.func @pcnn_kernel(%arg0: i32, %arg1: memref<2x16x32xf32, #tpu.memory_space<vmem>>, %arg2: memref<2x16x4xf32, #tpu.memory_space<vmem>>, %arg3: memref<128x128xf32, #tpu.memory_space<vmem>>, %arg4: memref<1x128xf32, #tpu.memory_space<vmem>>, %arg5: memref<384x128xf32, #tpu.memory_space<vmem>>, %arg6: memref<1x128xf32, #tpu.memory_space<vmem>>, %arg7: memref<2x128xf32, #tpu.memory_space<vmem>>) attributes {dimension_semantics = [#tpu.dimension_semantics<parallel>], iteration_bounds = array<i64: 1>, scalar_prefetch = 0 : i64, scratch_operands = 0 : i64, tpu.core_type = #tpu.core_type<tc>, window_params = [{transform_indices = @transform_0, window_bounds = array<i64: 2, 16, 32>}, {transform_indices = @transform_1, window_bounds = array<i64: 2, 16, 4>}, {pipeline_mode = #tpu.pipeline_mode<synchronous>, transform_indices = @transform_2, window_bounds = array<i64: 128, 128>}, {pipeline_mode = #tpu.pipeline_mode<synchronous>, transform_indices = @transform_3, window_bounds = array<i64: 1, 128>}, {pipeline_mode = #tpu.pipeline_mode<synchronous>, transform_indices = @transform_4, window_bounds = array<i64: 384, 128>}, {pipeline_mode = #tpu.pipeline_mode<synchronous>, transform_indices = @transform_5, window_bounds = array<i64: 1, 128>}, {transform_indices = @transform_6, window_bounds = array<i64: 2, 128>}]} {
    %c0 = arith.constant 0 : index
    %c0_0 = arith.constant 0 : index
    %c0_1 = arith.constant 0 : index
    %0 = vector.load %arg2[%c0, %c0_0, %c0_1] : memref<2x16x4xf32, #tpu.memory_space<vmem>>, vector<2x16x4xf32>
    %c0_2 = arith.constant 0 : index
    %c0_3 = arith.constant 0 : index
    %c0_4 = arith.constant 0 : index
    %1 = vector.load %arg1[%c0_2, %c0_3, %c0_4] : memref<2x16x32xf32, #tpu.memory_space<vmem>>, vector<2x16x32xf32>
    %2 = vector.extract_strided_slice %0 {offsets = [0, 0, 0], sizes = [2, 16, 1], strides = [1, 1, 1]} : vector<2x16x4xf32> to vector<2x16x1xf32>
    %3 = vector.broadcast %2 : vector<2x16x1xf32> to vector<2x16x32xf32>
    %4 = arith.mulf %1, %3 : vector<2x16x32xf32>
    %cst = arith.constant 0.000000e+00 : f32
    %5 = vector.broadcast %cst : f32 to vector<2x1x32xf32>
    %6 = vector.extract_strided_slice %4 {offsets = [0, 0, 0], sizes = [2, 15, 32], strides = [1, 1, 1]} : vector<2x16x32xf32> to vector<2x15x32xf32>
    %7 = tpu.concatenate %5, %6 in 1 : vector<2x1x32xf32>, vector<2x15x32xf32> -> vector<2x16x32xf32>
    %8 = vector.extract_strided_slice %4 {offsets = [0, 1, 0], sizes = [2, 15, 32], strides = [1, 1, 1]} : vector<2x16x32xf32> to vector<2x15x32xf32>
    %9 = tpu.concatenate %8, %5 in 1 : vector<2x15x32xf32>, vector<2x1x32xf32> -> vector<2x16x32xf32>
    %cst_5 = arith.constant 0.000000e+00 : f32
    %10 = vector.broadcast %cst_5 : f32 to vector<2x16x32xf32>
    %11 = tpu.concatenate %7, %4, %9, %10 in 2 : vector<2x16x32xf32>, vector<2x16x32xf32>, vector<2x16x32xf32>, vector<2x16x32xf32> -> vector<2x16x128xf32>
    %12 = vector.shape_cast %11 : vector<2x16x128xf32> to vector<32x128xf32>
    %c0_6 = arith.constant 0 : index
    %c0_7 = arith.constant 0 : index
    %13 = vector.load %arg3[%c0_6, %c0_7] : memref<128x128xf32, #tpu.memory_space<vmem>>, vector<128x128xf32>
    %cst_8 = arith.constant dense<0.000000e+00> : vector<32x128xf32>
    %14 = tpu.matmul %12, %13, %cst_8 {dimension_numbers = #tpu.dot_dimension_numbers<[1], [0], [0], [1], [0, 0, 1, 1], [], []>} : vector<32x128xf32>, vector<128x128xf32>, vector<32x128xf32> -> vector<32x128xf32>
    %c0_9 = arith.constant 0 : index
    %c0_10 = arith.constant 0 : index
    %15 = vector.load %arg4[%c0_9, %c0_10] : memref<1x128xf32, #tpu.memory_space<vmem>>, vector<1x128xf32>
    %16 = vector.broadcast %15 : vector<1x128xf32> to vector<32x128xf32>
    %17 = arith.addf %14, %16 : vector<32x128xf32>
    %18 = vector.shape_cast %17 : vector<32x128xf32> to vector<2x16x128xf32>
    %19 = vector.extract_strided_slice %0 {offsets = [0, 0, 1], sizes = [2, 16, 1], strides = [1, 1, 1]} : vector<2x16x4xf32> to vector<2x16x1xf32>
    %cst_11 = arith.constant 0.000000e+00 : f32
    %20 = vector.broadcast %cst_11 : f32 to vector<2x16x1xf32>
    %21 = arith.cmpf ogt, %19, %20 : vector<2x16x1xf32>
    %cst_12 = arith.constant 0xFF800000 : f32
    %22 = vector.shape_cast %21 : vector<2x16x1xi1> to vector<2x16x1xi1>
    %23 = vector.broadcast %22 : vector<2x16x1xi1> to vector<2x16x128xi1>
    %24 = vector.broadcast %cst_12 : f32 to vector<2x16x128xf32>
    %25 = arith.select %23, %18, %24 : vector<2x16x128xi1>, vector<2x16x128xf32>
    %cst_13 = arith.constant dense<0xFF800000> : vector<2x128xf32>
    %26 = vector.multi_reduction <maximumf>, %25, %cst_13 [1] : vector<2x16x128xf32> to vector<2x128xf32>
    %27 = math.tanh %26 : vector<2x128xf32>
    %28 = vector.extract_strided_slice %0 {offsets = [0, 0, 2], sizes = [2, 16, 1], strides = [1, 1, 1]} : vector<2x16x4xf32> to vector<2x16x1xf32>
    %cst_14 = arith.constant 0.000000e+00 : f32
    %29 = vector.broadcast %cst_14 : f32 to vector<2x16x1xf32>
    %30 = arith.cmpf ogt, %28, %29 : vector<2x16x1xf32>
    %cst_15 = arith.constant 0xFF800000 : f32
    %31 = vector.shape_cast %30 : vector<2x16x1xi1> to vector<2x16x1xi1>
    %32 = vector.broadcast %31 : vector<2x16x1xi1> to vector<2x16x128xi1>
    %33 = vector.broadcast %cst_15 : f32 to vector<2x16x128xf32>
    %34 = arith.select %32, %18, %33 : vector<2x16x128xi1>, vector<2x16x128xf32>
    %cst_16 = arith.constant dense<0xFF800000> : vector<2x128xf32>
    %35 = vector.multi_reduction <maximumf>, %34, %cst_16 [1] : vector<2x16x128xf32> to vector<2x128xf32>
    %36 = math.tanh %35 : vector<2x128xf32>
    %37 = vector.extract_strided_slice %0 {offsets = [0, 0, 3], sizes = [2, 16, 1], strides = [1, 1, 1]} : vector<2x16x4xf32> to vector<2x16x1xf32>
    %cst_17 = arith.constant 0.000000e+00 : f32
    %38 = vector.broadcast %cst_17 : f32 to vector<2x16x1xf32>
    %39 = arith.cmpf ogt, %37, %38 : vector<2x16x1xf32>
    %cst_18 = arith.constant 0xFF800000 : f32
    %40 = vector.shape_cast %39 : vector<2x16x1xi1> to vector<2x16x1xi1>
    %41 = vector.broadcast %40 : vector<2x16x1xi1> to vector<2x16x128xi1>
    %42 = vector.broadcast %cst_18 : f32 to vector<2x16x128xf32>
    %43 = arith.select %41, %18, %42 : vector<2x16x128xi1>, vector<2x16x128xf32>
    %cst_19 = arith.constant dense<0xFF800000> : vector<2x128xf32>
    %44 = vector.multi_reduction <maximumf>, %43, %cst_19 [1] : vector<2x16x128xf32> to vector<2x128xf32>
    %45 = math.tanh %44 : vector<2x128xf32>
    %46 = tpu.concatenate %27, %36, %45 in 1 : vector<2x128xf32>, vector<2x128xf32>, vector<2x128xf32> -> vector<2x384xf32>
    %c0_20 = arith.constant 0 : index
    %c0_21 = arith.constant 0 : index
    %47 = vector.load %arg5[%c0_20, %c0_21] : memref<384x128xf32, #tpu.memory_space<vmem>>, vector<384x128xf32>
    %cst_22 = arith.constant dense<0.000000e+00> : vector<2x128xf32>
    %48 = tpu.matmul %46, %47, %cst_22 {dimension_numbers = #tpu.dot_dimension_numbers<[1], [0], [0], [1], [0, 0, 1, 1], [], []>} : vector<2x384xf32>, vector<384x128xf32>, vector<2x128xf32> -> vector<2x128xf32>
    %c0_23 = arith.constant 0 : index
    %c0_24 = arith.constant 0 : index
    %49 = vector.load %arg6[%c0_23, %c0_24] : memref<1x128xf32, #tpu.memory_space<vmem>>, vector<1x128xf32>
    %50 = vector.broadcast %49 : vector<1x128xf32> to vector<2x128xf32>
    %51 = arith.addf %48, %50 : vector<2x128xf32>
    %c0_25 = arith.constant 0 : index
    %c0_26 = arith.constant 0 : index
    %52 = vector.load %arg7[%c0_25, %c0_26] : memref<2x128xf32, #tpu.memory_space<vmem>>, vector<2x128xf32>
    tpu.vector_store %arg7[%c0_25, %c0_26], %51 {strides = array<i32>} : memref<2x128xf32, #tpu.memory_space<vmem>>, vector<2x128xf32>,
    return
  }
  func.func @transform_0(%arg0: i32) -> (i32, i32, i32) {
    %c0_i32 = arith.constant 0 : i32
    %c0_i32_0 = arith.constant 0 : i32
    %c0_i32_1 = arith.constant 0 : i32
    return %arg0, %c0_i32, %c0_i32_0 : i32, i32, i32
  }
  func.func @transform_1(%arg0: i32) -> (i32, i32, i32) {
    %c0_i32 = arith.constant 0 : i32
    %c0_i32_0 = arith.constant 0 : i32
    %c0_i32_1 = arith.constant 0 : i32
    return %arg0, %c0_i32, %c0_i32_0 : i32, i32, i32
  }
  func.func @transform_2(%arg0: i32) -> (i32, i32) {
    %c0_i32 = arith.constant 0 : i32
    %c0_i32_0 = arith.constant 0 : i32
    %c0_i32_1 = arith.constant 0 : i32
    return %c0_i32, %c0_i32_0 : i32, i32
  }
  func.func @transform_3(%arg0: i32) -> (i32, i32) {
    %c0_i32 = arith.constant 0 : i32
    %c0_i32_0 = arith.constant 0 : i32
    %c0_i32_1 = arith.constant 0 : i32
    return %c0_i32, %c0_i32_0 : i32, i32
  }
  func.func @transform_4(%arg0: i32) -> (i32, i32) {
    %c0_i32 = arith.constant 0 : i32
    %c0_i32_0 = arith.constant 0 : i32
    %c0_i32_1 = arith.constant 0 : i32
    return %c0_i32, %c0_i32_0 : i32, i32
  }
  func.func @transform_5(%arg0: i32) -> (i32, i32) {
    %c0_i32 = arith.constant 0 : i32
    %c0_i32_0 = arith.constant 0 : i32
    %c0_i32_1 = arith.constant 0 : i32
    return %c0_i32, %c0_i32_0 : i32, i32
  }
  func.func @transform_6(%arg0: i32) -> (i32, i32) {
    %c0_i32 = arith.constant 0 : i32
    %c0_i32_0 = arith.constant 0 : i32
    return %arg0, %c0_i32 : i32, i32
  }
}

</mosaic_0001>

<llo_original>
// kernel: tpu_custom_call.1
$region0: #{tpu_custom_call.1}
  #allocation0 [shape = 'u32[]', space=smem, size = 0x4, offset = 0x4, fixed_abs, tag = 'smem constant byte address 0x4 - core index']
  #allocation1 [shape = 'u32[72,128]{1,0:T(1,128)}', space=vmem, size = 0x9000, scoped, tag = 'internal scratch']
  %s0 = inlined_call_operand.vmem [shape: f32[2,16,32], index: 0, kind: input, shape index: {}]
  %s1 = inlined_call_operand.vmem [shape: f32[2,16,4], index: 1, kind: input, shape index: {}]
  %s2 = inlined_call_operand.hbm [shape: f32[128,128], index: 2, kind: input, shape index: {}]
  %s3 = inlined_call_operand.vmem [shape: f32[1,128], index: 3, kind: input, shape index: {}]
  %s4 = inlined_call_operand.hbm [shape: f32[384,128], index: 4, kind: input, shape index: {}]
  %s5 = inlined_call_operand.vmem [shape: f32[1,128], index: 5, kind: input, shape index: {}]
  %s6 = inlined_call_operand.hbm [shape: f32[2,128], index: 6, kind: output, shape index: {}]
  %s7 = sld [smem:[#allocation0]]
  $region42: #{tpu_custom_call.1} parent=0
    _
  %s9 = ssub.s32 1, %s7
  %s10 = scalar_select 0, %s9, %s7
  $region1: #{tpu_custom_call.1} parent=0
    #allocation2 [shape = 'u8[65536]{0}', space=vmem, size = 0x10000, scoped, tag = 'input window, operand 2, single buffered']
    #allocation3 [shape = 's32[1]{0}', space=sflag, size = 0x4, scoped, tag = 'scoped memory for tpu_custom_call.1']
    #allocation4 [shape = 's32[1]{0}', space=sflag, size = 0x4, scoped, tag = 'scoped memory for tpu_custom_call.1']
    #allocation5 [shape = 'u8[196608]{0}', space=vmem, size = 0x30000, scoped, tag = 'input window, operand 4, single buffered']
    #allocation6 [shape = 's32[1]{0}', space=sflag, size = 0x4, scoped, tag = 'scoped memory for tpu_custom_call.1']
    #allocation7 [shape = 'u8[1024]{0}', space=vmem, size = 0x400, scoped, tag = 'output window, operand 0, single buffered']
    %11 = vsyncpa [#allocation3], 0
    %12 = vsyncpa [#allocation6], 0
    %13 = vsyncpa [#allocation4], 0
    // Predicated region
    $region2: #{tpu_custom_call.1} parent=1 // pred_check
      _
    $region3: #{tpu_custom_call.1} parent=1 // pred_check_branch
      %15 = sbr.rel (0) target = $region5
    $region4: #{tpu_custom_call.1} parent=1 // pred_region
      _
    $region5: #{tpu_custom_call.1} parent=1 // pred_fallthru
      _
    // Predicated region
    $region6: #{tpu_custom_call.1} parent=1 // pred_check
      _
    $region7: #{tpu_custom_call.1} parent=1 // pred_check_branch
      %17 = sbr.rel (0) target = $region9
    $region8: #{tpu_custom_call.1} parent=1 // pred_region
      _
    $region9: #{tpu_custom_call.1} parent=1 // pred_fallthru
      _
    // Predicated region
    $region10: #{tpu_custom_call.1} parent=1 // pred_check
      _
    $region11: #{tpu_custom_call.1} parent=1 // pred_check_branch
      %19 = sbr.rel (0) target = $region13
    $region12: #{tpu_custom_call.1} parent=1 // pred_region
      %21 = vsyncadd [#allocation3], 0
      %s22 = sshll.u32 %s2, 4
      %s23 = int_to_ptr.hbm [resolvable:$true] %s22
      %s24 = sshll.u32 [#allocation2], 4
      %s25 = int_to_ptr.vmem [resolvable:$true] %s24
      %30 = dma.hbm_to_vmem [thread:$0]  %s23, 2048, %s25, [#allocation3], 128, 128, 8
    $region13: #{tpu_custom_call.1} parent=1 // pred_fallthru
      _
    // Predicated region
    $region14: #{tpu_custom_call.1} parent=1 // pred_check
      _
    $region15: #{tpu_custom_call.1} parent=1 // pred_check_branch
      %32 = sbr.rel (0) target = $region17
    $region16: #{tpu_custom_call.1} parent=1 // pred_region
      _
    $region17: #{tpu_custom_call.1} parent=1 // pred_fallthru
      _
    // Predicated region
    $region18: #{tpu_custom_call.1} parent=1 // pred_check
      _
    $region19: #{tpu_custom_call.1} parent=1 // pred_check_branch
      %34 = sbr.rel (0) target = $region21
    $region20: #{tpu_custom_call.1} parent=1 // pred_region
      %36 = vsyncadd [#allocation6], 0
      %s37 = sshll.u32 %s4, 4
      %s38 = int_to_ptr.hbm [resolvable:$true] %s37
      %s39 = sshll.u32 [#allocation5], 4
      %s40 = int_to_ptr.vmem [resolvable:$true] %s39
      %45 = dma.hbm_to_vmem [thread:$0]  %s38, 6144, %s40, [#allocation6], 128, 128, 8
    $region21: #{tpu_custom_call.1} parent=1 // pred_fallthru
      _
    // Predicated region
    $region22: #{tpu_custom_call.1} parent=1 // pred_check
      _
    $region23: #{tpu_custom_call.1} parent=1 // pred_check_branch
      %47 = sbr.rel (0) target = $region25
    $region24: #{tpu_custom_call.1} parent=1 // pred_region
      _
    $region25: #{tpu_custom_call.1} parent=1 // pred_fallthru
      _
    // Predicated region
    $region26: #{tpu_custom_call.1} parent=1 // pred_check
      _
    $region27: #{tpu_custom_call.1} parent=1 // pred_check_branch
      %49 = sbr.rel (0) target = $region29
    $region28: #{tpu_custom_call.1} parent=1 // pred_region
      %51 = dma.done [#allocation3], 2048
    $region29: #{tpu_custom_call.1} parent=1 // pred_fallthru
      _
    // Predicated region
    $region30: #{tpu_custom_call.1} parent=1 // pred_check
      _
    $region31: #{tpu_custom_call.1} parent=1 // pred_check_branch
      %53 = sbr.rel (0) target = $region33
    $region32: #{tpu_custom_call.1} parent=1 // pred_region
      %55 = dma.done [#allocation6], 6144
    $region33: #{tpu_custom_call.1} parent=1 // pred_fallthru
      _
    %v56 = vld [vmem:[%s1] sm:$0xff]
    %v57 = vld [vmem:[%s1 + $0x8] sm:$0xff]
    %v58 = vld [vmem:[%s1 + $0x10] sm:$0xff]
    %v59 = vld [vmem:[%s1 + $0x18] sm:$0xff]
    %v60 = vld [vmem:[%s0] sm:$0xff]
    %v61 = vld [vmem:[%s0 + $0x8] sm:$0xff]
    %v62 = vld [vmem:[%s0 + $0x10] sm:$0xff]
    %v63 = vld [vmem:[%s0 + $0x18] sm:$0xff]
    %65 = vset.pattern.permute.xlu0 0
    %66 = vperm.xlu0 %65, %v56
    %v67 = vpop.permute.xlu0 %66
    %70 = vset.pattern.permute.xlu0 0
    %71 = vperm.xlu0 %70, %v57
    %v72 = vpop.permute.xlu0 %71
    %75 = vset.pattern.permute.xlu0 0
    %76 = vperm.xlu0 %75, %v58
    %v77 = vpop.permute.xlu0 %76
    %80 = vset.pattern.permute.xlu0 0
    %81 = vperm.xlu0 %80, %v59
    %v82 = vpop.permute.xlu0 %81
    %v84 = vmul.f32 %v60, %v67
    %v85 = vmul.f32 %v61, %v72
    %v86 = vmul.f32 %v62, %v77
    %v87 = vmul.f32 %v63, %v82
    %vm92 = vcmask 1040384
    %v93 = vrot.slane %v84, 7
    %v94 = vrot.slane %v85, 7
    %v95 = vsel %vm92, %v93, %v94
    %v96 = vrot.slane %v86, 7
    %v97 = vrot.slane %v87, 7
    %v98 = vsel %vm92, %v96, %v97
    %v103 = vsel %vm92, 0.0, %v93
    %v104 = vsel %vm92, 0.0, %v96
    %vm105 = vcmask 1046528
    %v106 = vrot.slane %v84, 1
    %v107 = vrot.slane %v85, 1
    %v108 = vsel %vm105, %v106, %v107
    %v109 = vrot.slane %v86, 1
    %v110 = vrot.slane %v87, 1
    %v111 = vsel %vm105, %v109, %v110
    %v114 = vsel %vm105, %v107, 0.0
    %v115 = vsel %vm105, %v110, 0.0
    %116 = vrot.lane.b32.xlu0 %v84, 32
    %v117 = vpop.permute.xlu0 %116
    %118 = vrot.lane.b32.xlu0 %v85, 32
    %v119 = vpop.permute.xlu0 %118
    %120 = vrot.lane.b32.xlu0 %v86, 32
    %v121 = vpop.permute.xlu0 %120
    %122 = vrot.lane.b32.xlu0 %v87, 32
    %v123 = vpop.permute.xlu0 %122
    %130 = vrot.lane.b32.xlu0 %v108, 64
    %v131 = vpop.permute.xlu0 %130
    %132 = vrot.lane.b32.xlu0 %v114, 64
    %v133 = vpop.permute.xlu0 %132
    %134 = vrot.lane.b32.xlu0 %v111, 64
    %v135 = vpop.permute.xlu0 %134
    %136 = vrot.lane.b32.xlu0 %v115, 64
    %v137 = vpop.permute.xlu0 %136
    %vm142 = vcmask 261120
    %v143 = vsel %vm142, %v103, %v117
    %v144 = vsel %vm142, %v95, %v119
    %v145 = vsel %vm142, %v104, %v121
    %v146 = vsel %vm142, %v98, %v123
    %vm147 = vcmask 523264
    %v148 = vsel %vm147, %v143, %v131
    %v149 = vsel %vm147, %v144, %v133
    %v150 = vsel %vm147, %v145, %v135
    %v151 = vsel %vm147, %v146, %v137
    %vm152 = vcmask 785408
    %v153 = vsel %vm152, %v148, 0.0
    %v154 = vsel %vm152, %v149, 0.0
    %v155 = vsel %vm152, %v150, 0.0
    %v156 = vsel %vm152, %v151, 0.0
    %v157 = vld [vmem:[#allocation2] sm:$0xff]
    %v158 = vld [vmem:[#allocation2 + $0x8] sm:$0xff]
    %v159 = vld [vmem:[#allocation2 + $0x10] sm:$0xff]
    %v160 = vld [vmem:[#allocation2 + $0x18] sm:$0xff]
    %v161 = vld [vmem:[#allocation2 + $0x20] sm:$0xff]
    %v162 = vld [vmem:[#allocation2 + $0x28] sm:$0xff]
    %v163 = vld [vmem:[#allocation2 + $0x30] sm:$0xff]
    %v164 = vld [vmem:[#allocation2 + $0x38] sm:$0xff]
    %v165 = vld [vmem:[#allocation2 + $0x40] sm:$0xff]
    %v166 = vld [vmem:[#allocation2 + $0x48] sm:$0xff]
    %v167 = vld [vmem:[#allocation2 + $0x50] sm:$0xff]
    %v168 = vld [vmem:[#allocation2 + $0x58] sm:$0xff]
    %v169 = vld [vmem:[#allocation2 + $0x60] sm:$0xff]
    %v170 = vld [vmem:[#allocation2 + $0x68] sm:$0xff]
    %v171 = vld [vmem:[#allocation2 + $0x70] sm:$0xff]
    %v172 = vld [vmem:[#allocation2 + $0x78] sm:$0xff]
    %v173 = vld [vmem:[%s3] sm:$0x1]
    %v175 = vperm.slane %v173, 0
    %177 = vmatpush.msra.mxu0 %v172
    %178 = vmatpush.msra.mxu0 %v171
    %179 = vmatpush.msra.mxu0 %v170
    %180 = vmatpush.msra.mxu0 %v169
    %181 = vmatpush.msra.mxu0 %v168
    %182 = vmatpush.msra.mxu0 %v167
    %183 = vmatpush.msra.mxu0 %v166
    %184 = vmatpush.msra.mxu0 %v165
    %185 = vmatpush.msra.mxu0 %v164
    %186 = vmatpush.msra.mxu0 %v163
    %187 = vmatpush.msra.mxu0 %v162
    %188 = vmatpush.msra.mxu0 %v161
    %189 = vmatpush.msra.mxu0 %v160
    %190 = vmatpush.msra.mxu0 %v159
    %191 = vmatpush.msra.mxu0 %v158
    %192 = vmatpush.msra.mxu0 %v157
    %193 = vmatmul.f32.gmra.mxu0 %v153
    %v194 = vpop.f32.mrf.mxu0
    %v195 = vadd.f32 %v175, %v194
    %196 = vmatmul.f32.gmra.mxu0 %v154
    %v197 = vpop.f32.mrf.mxu0
    %v198 = vadd.f32 %v175, %v197
    %199 = vmatmul.f32.gmra.mxu0 %v155
    %v200 = vpop.f32.mrf.mxu0
    %v201 = vadd.f32 %v175, %v200
    %202 = vmatmul.f32.gmra.mxu0 %v156
    %v203 = vpop.f32.mrf.mxu0
    %v204 = vadd.f32 %v175, %v203
    %205 = vdwg.mxu0
    %vm206 = vcmp.gt.f32.partialorder %v56, 0.0
    %vm207 = vcmp.gt.f32.partialorder %v57, 0.0
    %vm208 = vcmp.gt.f32.partialorder %v58, 0.0
    %vm209 = vcmp.gt.f32.partialorder %v59, 0.0
    %v210 = vsel %vm206, 1, 0
    %v211 = vsel %vm207, 1, 0
    %v212 = vsel %vm208, 1, 0
    %v213 = vsel %vm209, 1, 0
    %214 = vset.pattern.permute.xlu0 1
    %215 = vperm.xlu0 %214, %v210
    %v216 = vpop.permute.xlu0 %215
    %217 = vset.pattern.permute.xlu0 1
    %218 = vperm.xlu0 %217, %v211
    %v219 = vpop.permute.xlu0 %218
    %220 = vset.pattern.permute.xlu0 1
    %221 = vperm.xlu0 %220, %v212
    %v222 = vpop.permute.xlu0 %221
    %223 = vset.pattern.permute.xlu0 1
    %224 = vperm.xlu0 %223, %v213
    %v225 = vpop.permute.xlu0 %224
    %vm226 = vcmp.eq.s32.totalorder %v216, 1
    %vm227 = vcmp.eq.s32.totalorder %v219, 1
    %vm228 = vcmp.eq.s32.totalorder %v222, 1
    %vm229 = vcmp.eq.s32.totalorder %v225, 1
    %v230 = vsel %vm226, %v195, -inf
    %v231 = vsel %vm227, %v198, -inf
    %v232 = vsel %vm228, %v201, -inf
    %v233 = vsel %vm229, %v204, -inf
    %v234 = vmax.f32 %v230, %v231
    %v235 = vrot.slane %v234, 4
    %v236 = vmax.f32 %v234, %v235
    %v237 = vrot.slane %v236, 2
    %v238 = vmax.f32 %v236, %v237
    %v239 = vrot.slane %v238, 1
    %v240 = vmax.f32 %v238, %v239
    %v241 = vmax.f32 %v232, %v233
    %v242 = vrot.slane %v241, 4
    %v243 = vmax.f32 %v241, %v242
    %v244 = vrot.slane %v243, 2
    %v245 = vmax.f32 %v243, %v244
    %v246 = vrot.slane %v245, 1
    %v247 = vmax.f32 %v245, %v246
    %v248 = vtanh.pop %v240
    %v249 = vtanh.pop %v247
    %250 = vset.pattern.permute.xlu0 2
    %251 = vperm.xlu0 %250, %v210
    %v252 = vpop.permute.xlu0 %251
    %253 = vset.pattern.permute.xlu0 2
    %254 = vperm.xlu0 %253, %v211
    %v255 = vpop.permute.xlu0 %254
    %256 = vset.pattern.permute.xlu0 2
    %257 = vperm.xlu0 %256, %v212
    %v258 = vpop.permute.xlu0 %257
    %259 = vset.pattern.permute.xlu0 2
    %260 = vperm.xlu0 %259, %v213
    %v261 = vpop.permute.xlu0 %260
    %vm262 = vcmp.eq.s32.totalorder %v252, 1
    %vm263 = vcmp.eq.s32.totalorder %v255, 1
    %vm264 = vcmp.eq.s32.totalorder %v258, 1
    %vm265 = vcmp.eq.s32.totalorder %v261, 1
    %v266 = vsel %vm262, %v195, -inf
    %v267 = vsel %vm263, %v198, -inf
    %v268 = vsel %vm264, %v201, -inf
    %v269 = vsel %vm265, %v204, -inf
    %v270 = vmax.f32 %v266, %v267
    %v271 = vrot.slane %v270, 4
    %v272 = vmax.f32 %v270, %v271
    %v273 = vrot.slane %v272, 2
    %v274 = vmax.f32 %v272, %v273
    %v275 = vrot.slane %v274, 1
    %v276 = vmax.f32 %v274, %v275
    %v277 = vmax.f32 %v268, %v269
    %v278 = vrot.slane %v277, 4
    %v279 = vmax.f32 %v277, %v278
    %v280 = vrot.slane %v279, 2
    %v281 = vmax.f32 %v279, %v280
    %v282 = vrot.slane %v281, 1
    %v283 = vmax.f32 %v281, %v282
    %v284 = vtanh.pop %v276
    %v285 = vtanh.pop %v283
    %286 = vset.pattern.permute.xlu0 3
    %287 = vperm.xlu0 %286, %v210
    %v288 = vpop.permute.xlu0 %287
    %289 = vset.pattern.permute.xlu0 3
    %290 = vperm.xlu0 %289, %v211
    %v291 = vpop.permute.xlu0 %290
    %292 = vset.pattern.permute.xlu0 3
    %293 = vperm.xlu0 %292, %v212
    %v294 = vpop.permute.xlu0 %293
    %295 = vset.pattern.permute.xlu0 3
    %296 = vperm.xlu0 %295, %v213
    %v297 = vpop.permute.xlu0 %296
    %vm298 = vcmp.eq.s32.totalorder %v288, 1
    %vm299 = vcmp.eq.s32.totalorder %v291, 1
    %vm300 = vcmp.eq.s32.totalorder %v294, 1
    %vm301 = vcmp.eq.s32.totalorder %v297, 1
    %v302 = vsel %vm298, %v195, -inf
    %v303 = vsel %vm299, %v198, -inf
    %v304 = vsel %vm300, %v201, -inf
    %v305 = vsel %vm301, %v204, -inf
    %v306 = vmax.f32 %v302, %v303
    %v307 = vrot.slane %v306, 4
    %v308 = vmax.f32 %v306, %v307
    %v309 = vrot.slane %v308, 2
    %v310 = vmax.f32 %v308, %v309
    %v311 = vrot.slane %v310, 1
    %v312 = vmax.f32 %v310, %v311
    %v313 = vmax.f32 %v304, %v305
    %v314 = vrot.slane %v313, 4
    %v315 = vmax.f32 %v313, %v314
    %v316 = vrot.slane %v315, 2
    %v317 = vmax.f32 %v315, %v316
    %v318 = vrot.slane %v317, 1
    %v319 = vmax.f32 %v317, %v318
    %v320 = vtanh.pop %v312
    %v321 = vtanh.pop %v319
    %vm324 = vcmask 1041409
    %v325 = vsel %vm324, %v249, %v248
    %v329 = vsel %vm324, %v285, %v284
    %v333 = vsel %vm324, %v321, %v320
    %v335 = vld [vmem:[#allocation5] sm:$0xff]
    %v336 = vld [vmem:[#allocation5 + $0x8] sm:$0xff]
    %v337 = vld [vmem:[#allocation5 + $0x10] sm:$0xff]
    %v338 = vld [vmem:[#allocation5 + $0x18] sm:$0xff]
    %v339 = vld [vmem:[#allocation5 + $0x20] sm:$0xff]
    %v340 = vld [vmem:[#allocation5 + $0x28] sm:$0xff]
    %v341 = vld [vmem:[#allocation5 + $0x30] sm:$0xff]
    %v342 = vld [vmem:[#allocation5 + $0x38] sm:$0xff]
    %v343 = vld [vmem:[#allocation5 + $0x40] sm:$0xff]
    %v344 = vld [vmem:[#allocation5 + $0x48] sm:$0xff]
    %v345 = vld [vmem:[#allocation5 + $0x50] sm:$0xff]
    %v346 = vld [vmem:[#allocation5 + $0x58] sm:$0xff]
    %v347 = vld [vmem:[#allocation5 + $0x60] sm:$0xff]
    %v348 = vld [vmem:[#allocation5 + $0x68] sm:$0xff]
    %v349 = vld [vmem:[#allocation5 + $0x70] sm:$0xff]
    %v350 = vld [vmem:[#allocation5 + $0x78] sm:$0xff]
    %v351 = vld [vmem:[#allocation5 + $0x80] sm:$0xff]
    %v352 = vld [vmem:[#allocation5 + $0x88] sm:$0xff]
    %v353 = vld [vmem:[#allocation5 + $0x90] sm:$0xff]
    %v354 = vld [vmem:[#allocation5 + $0x98] sm:$0xff]
    %v355 = vld [vmem:[#allocation5 + $0xa0] sm:$0xff]
    %v356 = vld [vmem:[#allocation5 + $0xa8] sm:$0xff]
    %v357 = vld [vmem:[#allocation5 + $0xb0] sm:$0xff]
    %v358 = vld [vmem:[#allocation5 + $0xb8] sm:$0xff]
    %v359 = vld [vmem:[#allocation5 + $0xc0] sm:$0xff]
    %v360 = vld [vmem:[#allocation5 + $0xc8] sm:$0xff]
    %v361 = vld [vmem:[#allocation5 + $0xd0] sm:$0xff]
    %v362 = vld [vmem:[#allocation5 + $0xd8] sm:$0xff]
    %v363 = vld [vmem:[#allocation5 + $0xe0] sm:$0xff]
    %v364 = vld [vmem:[#allocation5 + $0xe8] sm:$0xff]
    %v365 = vld [vmem:[#allocation5 + $0xf0] sm:$0xff]
    %v366 = vld [vmem:[#allocation5 + $0xf8] sm:$0xff]
    %v367 = vld [vmem:[#allocation5 + $0x100] sm:$0xff]
    %v368 = vld [vmem:[#allocation5 + $0x108] sm:$0xff]
    %v369 = vld [vmem:[#allocation5 + $0x110] sm:$0xff]
    %v370 = vld [vmem:[#allocation5 + $0x118] sm:$0xff]
    %v371 = vld [vmem:[#allocation5 + $0x120] sm:$0xff]
    %v372 = vld [vmem:[#allocation5 + $0x128] sm:$0xff]
    %v373 = vld [vmem:[#allocation5 + $0x130] sm:$0xff]
    %v374 = vld [vmem:[#allocation5 + $0x138] sm:$0xff]
    %v375 = vld [vmem:[#allocation5 + $0x140] sm:$0xff]
    %v376 = vld [vmem:[#allocation5 + $0x148] sm:$0xff]
    %v377 = vld [vmem:[#allocation5 + $0x150] sm:$0xff]
    %v378 = vld [vmem:[#allocation5 + $0x158] sm:$0xff]
    %v379 = vld [vmem:[#allocation5 + $0x160] sm:$0xff]
    %v380 = vld [vmem:[#allocation5 + $0x168] sm:$0xff]
    %v381 = vld [vmem:[#allocation5 + $0x170] sm:$0xff]
    %v382 = vld [vmem:[#allocation5 + $0x178] sm:$0xff]
    %v383 = vld [vmem:[%s5] sm:$0x1]
    %v385 = vperm.slane %v383, 0
    %387 = vmatpush.msra.mxu0 %v350
    %388 = vmatpush.msra.mxu0 %v349
    %389 = vmatpush.msra.mxu0 %v348
    %390 = vmatpush.msra.mxu0 %v347
    %391 = vmatpush.msra.mxu0 %v346
    %392 = vmatpush.msra.mxu0 %v345
    %393 = vmatpush.msra.mxu0 %v344
    %394 = vmatpush.msra.mxu0 %v343
    %395 = vmatpush.msra.mxu0 %v342
    %396 = vmatpush.msra.mxu0 %v341
    %397 = vmatpush.msra.mxu0 %v340
    %398 = vmatpush.msra.mxu0 %v339
    %399 = vmatpush.msra.mxu0 %v338
    %400 = vmatpush.msra.mxu0 %v337
    %401 = vmatpush.msra.mxu0 %v336
    %402 = vmatpush.msra.mxu0 %v335
    %403 = vmatmul.f32.gmra.mxu0 %v325
    %v404 = vpop.f32.mrf.mxu0
    %v405 = vadd.f32 %v385, %v404
    %406 = vdwg.mxu0
    %407 = vmatpush.msra.mxu0 %v366
    %408 = vmatpush.msra.mxu0 %v365
    %409 = vmatpush.msra.mxu0 %v364
    %410 = vmatpush.msra.mxu0 %v363
    %411 = vmatpush.msra.mxu0 %v362
    %412 = vmatpush.msra.mxu0 %v361
    %413 = vmatpush.msra.mxu0 %v360
    %414 = vmatpush.msra.mxu0 %v359
    %415 = vmatpush.msra.mxu0 %v358
    %416 = vmatpush.msra.mxu0 %v357
    %417 = vmatpush.msra.mxu0 %v356
    %418 = vmatpush.msra.mxu0 %v355
    %419 = vmatpush.msra.mxu0 %v354
    %420 = vmatpush.msra.mxu0 %v353
    %421 = vmatpush.msra.mxu0 %v352
    %422 = vmatpush.msra.mxu0 %v351
    %423 = vmatmul.f32.gmra.mxu0 %v329
    %v424 = vpop.f32.mrf.mxu0
    %v425 = vadd.f32 %v405, %v424
    %426 = vdwg.mxu0
    %427 = vmatpush.msra.mxu0 %v382
    %428 = vmatpush.msra.mxu0 %v381
    %429 = vmatpush.msra.mxu0 %v380
    %430 = vmatpush.msra.mxu0 %v379
    %431 = vmatpush.msra.mxu0 %v378
    %432 = vmatpush.msra.mxu0 %v377
    %433 = vmatpush.msra.mxu0 %v376
    %434 = vmatpush.msra.mxu0 %v375
    %435 = vmatpush.msra.mxu0 %v374
    %436 = vmatpush.msra.mxu0 %v373
    %437 = vmatpush.msra.mxu0 %v372
    %438 = vmatpush.msra.mxu0 %v371
    %439 = vmatpush.msra.mxu0 %v370
    %440 = vmatpush.msra.mxu0 %v369
    %441 = vmatpush.msra.mxu0 %v368
    %442 = vmatpush.msra.mxu0 %v367
    %443 = vmatmul.f32.gmra.mxu0 %v333
    %v444 = vpop.f32.mrf.mxu0
    %v445 = vadd.f32 %v425, %v444
    %446 = vdwg.mxu0
    %447 = vst [vmem:[#allocation7] sm:$0x3] %v445
    // Predicated region
    $region34: #{tpu_custom_call.1} parent=1 // pred_check
      _
    $region35: #{tpu_custom_call.1} parent=1 // pred_check_branch
      %449 = sbr.rel (0) target = $region37
    $region36: #{tpu_custom_call.1} parent=1 // pred_region
      %451 = vsyncadd [#allocation4], 0
      %s453 = sshll.u32 [#allocation7], 4
      %s454 = int_to_ptr.vmem [resolvable:$true] %s453
      %s455 = sshll.u32 %s6, 4
      %s456 = int_to_ptr.hbm [resolvable:$true] %s455
      %458 = dma.vmem_to_hbm [thread:$0]  %s454, 32, %s456, [#allocation4]
    $region37: #{tpu_custom_call.1} parent=1 // pred_fallthru
      _
    // Predicated region
    $region38: #{tpu_custom_call.1} parent=1 // pred_check
      _
    $region39: #{tpu_custom_call.1} parent=1 // pred_check_branch
      %460 = sbr.rel (0) target = $region41
    $region40: #{tpu_custom_call.1} parent=1 // pred_region
      %462 = dma.done [#allocation4], 32
    $region41: #{tpu_custom_call.1} parent=1 // pred_fallthru
      _
    %463 = vsyncpa [#allocation3], 1
    %464 = vsyncpa [#allocation6], 1
    %465 = vsyncpa [#allocation4], 1

</llo_original>
